<compile_context>
chip_gen: v7x
topology: tpu7x:2x2x1
jax: 0.10.0
libtpu: 0.0.40
codegen_flags: <defaults>
</compile_context>

<pallas_src>
import functools

import jax
import jax.numpy as jnp
from jax.experimental import pallas as pl
from jax.experimental.pallas import tpu as pltpu


def _input_block_kernel(x_ref, w1sc_ref, w2_ref, bn_scale_ref, bn_shift_ref,
                        out_ref, p1_ref, y_ref, p2_ref, *,
                        bblk, cin_pad, cout, wp, nq1, nq2):
    # x_ref:     (Bblk, CIN_PAD, NFLAT) f32  zero-padded images (1-px halo +
    #            slack rows + zero channels), spatial flattened row-major (Wp).
    # w1sc_ref:  (2*Cout, 9*CIN_PAD) f32  rows [0,Cout)   = conv1 taps (dh,dw,ci)
    #                                     rows [Cout,2C)  = 1x1 shortcut @ tap (1,1)
    # w2_ref:    (Cout, 9*Cout) f32       conv2 taps (dh,dw,c)
    # bn_*_ref:  (Cout, 1) f32            folded eval-mode BatchNorm scale/shift
    # out_ref:   (Bblk, Cout, nq2) f32    conv2 output in flat padded coords
    # p1_ref:    (9*CIN_PAD, Bblk*nq1) f32  conv1 im2col patches
    # y_ref:     (Cout,      Bblk*nq1) f32  x1 + BN(ReLU(conv1)) intermediate
    # p2_ref:    (9*Cout,    Bblk*nq2) f32  conv2 im2col patches
    #
    # Flat-coordinate conv trick: with each image zero-padded and flattened
    # row-major over width Wp, the 3x3 tap (dh, dw) of every output pixel sits
    # at flat offset dh*Wp + dw.  Values at the padded columns are garbage but
    # are never consumed by conv2's valid windows and are sliced off outside.

    # ---- im2col for conv1 (+shortcut); all stores are (8,128)-tile aligned.
    for b in range(bblk):
        for dh in range(3):
            for dw in range(3):
                t = dh * 3 + dw
                off = dh * wp + dw
                p1_ref[t * cin_pad:(t + 1) * cin_pad,
                       b * nq1:(b + 1) * nq1] = x_ref[b, :, off:off + nq1]

    # ---- single MXU matmul: conv1 (K = 9*CIN_PAD) and 1x1 shortcut stacked on M.
    f = jnp.dot(w1sc_ref[...], p1_ref[...],
                preferred_element_type=jnp.float32)     # (2*Cout, Bblk*nq1)
    c1 = f[:cout, :]                                    # conv1 (pad=1) output
    x1 = f[cout:, :]                                    # shortcut output

    # ReLU -> BatchNorm (eval, folded) -> Dropout2d (eval = identity)
    x2 = jnp.maximum(c1, 0.0) * bn_scale_ref[...] + bn_shift_ref[...]
    y_ref[...] = (x1 + x2).astype(y_ref.dtype)          # (Cout, Bblk*nq1)

    # ---- im2col for conv2 (valid conv, same flat-coordinate trick)
    for b in range(bblk):
        for dh in range(3):
            for dw in range(3):
                t = dh * 3 + dw
                off = dh * wp + dw
                p2_ref[t * cout:(t + 1) * cout,
                       b * nq2:(b + 1) * nq2] = \
                    y_ref[:, b * nq1 + off:b * nq1 + off + nq2]

    out = jnp.dot(w2_ref[...], p2_ref[...],
                  preferred_element_type=jnp.float32)   # (Cout, Bblk*nq2)
    for b in range(bblk):
        out_ref[b] = out[:, b * nq2:(b + 1) * nq2].astype(out_ref.dtype)


def _round_up(x, m):
    return -(-x // m) * m


@jax.jit
def input_block_forward(x_nchw, w1_oihw, wsc_oi, w2_oihw, bn_scale, bn_shift):
    """x_nchw: (B, Cin, H, W) f32 -> (B, Cout, H-2, W-2) f32 (eval-mode InputBlock)."""
    B, Cin, H, W = x_nchw.shape
    Cout = w1_oihw.shape[0]
    # TODO(synk): generalize to out_channels not a multiple of 8 (pad y/p2 rows).
    assert Cout % 8 == 0, "this kernel assumes out_channels % 8 == 0"

    CIN_PAD = _round_up(Cin, 8)                  # sublane-aligned per-tap groups
    Wp = W + 2                                   # padded width (flat row stride)
    NQ2 = (H - 2) * Wp                           # real conv2 extent (flat coords)
    NQ2P = _round_up(NQ2, 128)                   # lane-dense conv2 / output extent
    NQ1P = _round_up(NQ2P + 2 * Wp + 2, 128)     # lane-dense conv1 / y extent
    need = NQ1P + 2 * Wp + 2                     # flat input extent read by conv1 taps
    rows = -(-need // Wp)                        # padded rows incl. slack
    pad_bottom = rows - (H + 1)
    NFLAT = rows * Wp

    # --- input: zero channels to CIN_PAD, 1-px halo + bottom slack rows, flatten.
    x_pad = jnp.pad(x_nchw.astype(jnp.float32),
                    ((0, 0), (0, CIN_PAD - Cin), (1, pad_bottom), (1, 1)))
    x_flat = x_pad.reshape(B, CIN_PAD, NFLAT)

    # --- weights: conv1 OIHW -> (Cout, 9*CIN_PAD), tap-major (dh, dw, ci); zero
    #     columns in the channel-padding slots.
    w1t = jnp.transpose(w1_oihw, (0, 2, 3, 1)).astype(jnp.float32)     # (Cout,3,3,Cin)
    w1t = jnp.pad(w1t, ((0, 0), (0, 0), (0, 0), (0, CIN_PAD - Cin)))
    w1m = w1t.reshape(Cout, 9 * CIN_PAD)
    # 1x1 shortcut embedded at the centre tap (dh=1, dw=1) so it shares the matmul.
    wsc3 = jnp.zeros((Cout, 3, 3, CIN_PAD), jnp.float32)
    wsc3 = wsc3.at[:, 1, 1, :Cin].set(wsc_oi.astype(jnp.float32))
    w1sc = jnp.concatenate([w1m, wsc3.reshape(Cout, 9 * CIN_PAD)], axis=0)
    w2m = jnp.transpose(w2_oihw, (0, 2, 3, 1)).reshape(Cout, 9 * Cout)
    w2m = w2m.astype(jnp.float32)

    bn_scale2 = bn_scale.reshape(Cout, 1).astype(jnp.float32)
    bn_shift2 = bn_shift.reshape(Cout, 1).astype(jnp.float32)

    # --- images per grid step: fattest block whose grid still has >= 2 steps
    #     (keeps both v7x TensorCores busy; v5e/v6e just get fewer serial steps),
    #     capped so the per-step scratch working set stays well inside VMEM.
    per_img_bytes = ((9 * CIN_PAD + Cout) * NQ1P + 9 * Cout * NQ2P) * 4
    max_bblk = max(1, (24 * 1024 * 1024) // per_img_bytes)
    Bblk = 1
    for cand in range(1, B + 1):
        if cand <= max_bblk and B % cand == 0 and (B // cand >= 2 or B == 1):
            Bblk = cand
    n_blocks = B // Bblk

    kernel = functools.partial(_input_block_kernel, bblk=Bblk, cin_pad=CIN_PAD,
                               cout=Cout, wp=Wp, nq1=NQ1P, nq2=NQ2P)

    out_flat = pl.pallas_call(
        kernel,
        out_shape=jax.ShapeDtypeStruct((B, Cout, NQ2P), jnp.float32),
        grid_spec=pltpu.PrefetchScalarGridSpec(
            num_scalar_prefetch=0,
            grid=(n_blocks,),
            in_specs=[
                pl.BlockSpec((Bblk, CIN_PAD, NFLAT), lambda g: (g, 0, 0)),
                pl.BlockSpec((2 * Cout, 9 * CIN_PAD), lambda g: (0, 0)),
                pl.BlockSpec((Cout, 9 * Cout), lambda g: (0, 0)),
                pl.BlockSpec((Cout, 1), lambda g: (0, 0)),
                pl.BlockSpec((Cout, 1), lambda g: (0, 0)),
            ],
            out_specs=pl.BlockSpec((Bblk, Cout, NQ2P), lambda g: (g, 0, 0)),
            scratch_shapes=[
                pltpu.VMEM((9 * CIN_PAD, Bblk * NQ1P), jnp.float32),  # conv1 im2col
                pltpu.VMEM((Cout, Bblk * NQ1P), jnp.float32),         # y = x1 + x2
                pltpu.VMEM((9 * Cout, Bblk * NQ2P), jnp.float32),     # conv2 im2col
            ],
        ),
        compiler_params=pltpu.CompilerParams(
            dimension_semantics=("parallel",),
            vmem_limit_bytes=32 * 1024 * 1024,
        ),
    )(x_flat, w1sc, w2m, bn_scale2, bn_shift2)

    # Drop the lane padding, unflatten (free row-major reshape), drop the
    # garbage padded columns.
    out = out_flat[:, :, :NQ2].reshape(B, Cout, H - 2, Wp)[:, :, :, :W - 2]
    return out


def _reference_forward(x_nchw, w1_oihw, wsc_oi, w2_oihw, bn_scale, bn_shift):
    """Pure-JAX f32 NCHW reference using lax.conv, for validation."""
    dn = ('NCHW', 'OIHW', 'NCHW')
    x2 = jax.lax.conv_general_dilated(x_nchw, w1_oihw, (1, 1), [(1, 1), (1, 1)],
                                      dimension_numbers=dn)
    x2 = jnp.maximum(x2, 0.0)
    x2 = x2 * bn_scale[None, :, None, None] + bn_shift[None, :, None, None]
    wsc4 = wsc_oi[:, :, None, None]
    x1 = jax.lax.conv_general_dilated(x_nchw, wsc4, (1, 1), [(0, 0), (0, 0)],
                                      dimension_numbers=dn)
    y = x1 + x2
    return jax.lax.conv_general_dilated(y, w2_oihw, (1, 1), [(0, 0), (0, 0)],
                                        dimension_numbers=dn)


if __name__ == "__main__":
    B, Cin, Cout, H, W = 2, 4, 8, 16, 16

    key = jax.random.PRNGKey(0)
    kx, k1, ksc, k2, kg, kb, km, kv, kx2 = jax.random.split(key, 9)

    x = jax.random.normal(kx, (B, Cin, H, W), dtype=jnp.float32)

    # Deterministic synthetic parameters (PyTorch OIHW layout for conv weights).
    w1 = 0.1 * jax.random.normal(k1, (Cout, Cin, 3, 3), dtype=jnp.float32)
    wsc = 0.1 * jax.random.normal(ksc, (Cout, Cin), dtype=jnp.float32)
    w2 = 0.1 * jax.random.normal(k2, (Cout, Cout, 3, 3), dtype=jnp.float32)

    # BatchNorm2d(out_channels), eval mode, eps=1e-5, folded to scale/shift.
    gamma = 1.0 + 0.1 * jax.random.normal(kg, (Cout,), dtype=jnp.float32)
    beta = 0.1 * jax.random.normal(kb, (Cout,), dtype=jnp.float32)
    running_mean = 0.05 * jax.random.normal(km, (Cout,), dtype=jnp.float32)
    running_var = 1.0 + 0.1 * jax.random.uniform(kv, (Cout,), dtype=jnp.float32)
    eps = 1e-5
    bn_scale = gamma / jnp.sqrt(running_var + eps)
    bn_shift = beta - running_mean * bn_scale

    # --- main check: B=2 (one image per grid step, 2 parallel steps) ---
    out = jax.block_until_ready(input_block_forward(x, w1, wsc, w2, bn_scale, bn_shift))
    ref = _reference_forward(x, w1, wsc, w2, bn_scale, bn_shift)
    assert out.shape == (B, Cout, H - 2, W - 2), out.shape
    # MXU truncates operands to bf16 at default precision -> loose-ish tolerance.
    max_err = float(jnp.max(jnp.abs(out - ref)))
    assert jnp.allclose(out, ref, atol=5e-2, rtol=5e-2), max_err

    # --- second check: B=8 exercises the multi-image-per-grid-step path (Bblk=4) ---
    xb = jax.random.normal(kx2, (8, Cin, H, W), dtype=jnp.float32)
    outb = jax.block_until_ready(
        input_block_forward(xb, w1, wsc, w2, bn_scale, bn_shift))
    refb = _reference_forward(xb, w1, wsc, w2, bn_scale, bn_shift)
    assert outb.shape == (8, Cout, H - 2, W - 2), outb.shape
    max_err_b = float(jnp.max(jnp.abs(outb - refb)))
    assert jnp.allclose(outb, refb, atol=5e-2, rtol=5e-2), max_err_b

    print("KERNEL_OK")
</pallas_src>

<mosaic_0001>
module attributes {stable_mosaic.version = 11 : i64} {
  func.func @_input_block_kernel(%arg0: i32, %arg1: memref<1x8x432xf32, #tpu.memory_space<vmem>>, %arg2: memref<16x72xf32, #tpu.memory_space<vmem>>, %arg3: memref<8x72xf32, #tpu.memory_space<vmem>>, %arg4: memref<8x1xf32, #tpu.memory_space<vmem>>, %arg5: memref<8x1xf32, #tpu.memory_space<vmem>>, %arg6: memref<1x8x256xf32, #tpu.memory_space<vmem>>, %arg7: memref<72x384xf32, #tpu.memory_space<vmem>>, %arg8: memref<8x384xf32, #tpu.memory_space<vmem>>, %arg9: memref<72x256xf32, #tpu.memory_space<vmem>>) attributes {dimension_semantics = [#tpu.dimension_semantics<parallel>], iteration_bounds = array<i64: 2>, scalar_prefetch = 0 : i64, scratch_operands = 3 : i64, tpu.core_type = #tpu.core_type<tc>, window_params = [{transform_indices = @transform_0, window_bounds = array<i64: 1, 8, 432>}, {pipeline_mode = #tpu.pipeline_mode<synchronous>, transform_indices = @transform_1, window_bounds = array<i64: 16, 72>}, {pipeline_mode = #tpu.pipeline_mode<synchronous>, transform_indices = @transform_2, window_bounds = array<i64: 8, 72>}, {pipeline_mode = #tpu.pipeline_mode<synchronous>, transform_indices = @transform_3, window_bounds = array<i64: 8, 1>}, {pipeline_mode = #tpu.pipeline_mode<synchronous>, transform_indices = @transform_4, window_bounds = array<i64: 8, 1>}, {transform_indices = @transform_5, window_bounds = array<i64: 1, 8, 256>}]} {
    %c0 = arith.constant 0 : index
    %c0_0 = arith.constant 0 : index
    %c0_1 = arith.constant 0 : index
    %0 = vector.load %arg1[%c0, %c0_0, %c0_1] : memref<1x8x432xf32, #tpu.memory_space<vmem>>, vector<1x8x384xf32>
    %1 = vector.shape_cast %0 : vector<1x8x384xf32> to vector<8x384xf32>
    %c0_2 = arith.constant 0 : index
    %c0_3 = arith.constant 0 : index
    %2 = vector.load %arg7[%c0_2, %c0_3] : memref<72x384xf32, #tpu.memory_space<vmem>>, vector<8x384xf32>
    tpu.vector_store %arg7[%c0_2, %c0_3], %1 {strides = array<i32>} : memref<72x384xf32, #tpu.memory_space<vmem>>, vector<8x384xf32>,
    %c0_4 = arith.constant 0 : index
    %c0_5 = arith.constant 0 : index
    %c1 = arith.constant 1 : index
    %3 = vector.load %arg1[%c0_4, %c0_5, %c1] : memref<1x8x432xf32, #tpu.memory_space<vmem>>, vector<1x8x384xf32>
    %4 = vector.shape_cast %3 : vector<1x8x384xf32> to vector<8x384xf32>
    %c8 = arith.constant 8 : index
    %c0_6 = arith.constant 0 : index
    %5 = vector.load %arg7[%c8, %c0_6] : memref<72x384xf32, #tpu.memory_space<vmem>>, vector<8x384xf32>
    tpu.vector_store %arg7[%c8, %c0_6], %4 {strides = array<i32>} : memref<72x384xf32, #tpu.memory_space<vmem>>, vector<8x384xf32>,
    %c0_7 = arith.constant 0 : index
    %c0_8 = arith.constant 0 : index
    %c2 = arith.constant 2 : index
    %6 = vector.load %arg1[%c0_7, %c0_8, %c2] : memref<1x8x432xf32, #tpu.memory_space<vmem>>, vector<1x8x384xf32>
    %7 = vector.shape_cast %6 : vector<1x8x384xf32> to vector<8x384xf32>
    %c16 = arith.constant 16 : index
    %c0_9 = arith.constant 0 : index
    %8 = vector.load %arg7[%c16, %c0_9] : memref<72x384xf32, #tpu.memory_space<vmem>>, vector<8x384xf32>
    tpu.vector_store %arg7[%c16, %c0_9], %7 {strides = array<i32>} : memref<72x384xf32, #tpu.memory_space<vmem>>, vector<8x384xf32>,
    %c0_10 = arith.constant 0 : index
    %c0_11 = arith.constant 0 : index
    %c18 = arith.constant 18 : index
    %9 = vector.load %arg1[%c0_10, %c0_11, %c18] : memref<1x8x432xf32, #tpu.memory_space<vmem>>, vector<1x8x384xf32>
    %10 = vector.shape_cast %9 : vector<1x8x384xf32> to vector<8x384xf32>
    %c24 = arith.constant 24 : index
    %c0_12 = arith.constant 0 : index
    %11 = vector.load %arg7[%c24, %c0_12] : memref<72x384xf32, #tpu.memory_space<vmem>>, vector<8x384xf32>
    tpu.vector_store %arg7[%c24, %c0_12], %10 {strides = array<i32>} : memref<72x384xf32, #tpu.memory_space<vmem>>, vector<8x384xf32>,
    %c0_13 = arith.constant 0 : index
    %c0_14 = arith.constant 0 : index
    %c19 = arith.constant 19 : index
    %12 = vector.load %arg1[%c0_13, %c0_14, %c19] : memref<1x8x432xf32, #tpu.memory_space<vmem>>, vector<1x8x384xf32>
    %13 = vector.shape_cast %12 : vector<1x8x384xf32> to vector<8x384xf32>
    %c32 = arith.constant 32 : index
    %c0_15 = arith.constant 0 : index
    %14 = vector.load %arg7[%c32, %c0_15] : memref<72x384xf32, #tpu.memory_space<vmem>>, vector<8x384xf32>
    tpu.vector_store %arg7[%c32, %c0_15], %13 {strides = array<i32>} : memref<72x384xf32, #tpu.memory_space<vmem>>, vector<8x384xf32>,
    %c0_16 = arith.constant 0 : index
    %c0_17 = arith.constant 0 : index
    %c20 = arith.constant 20 : index
    %15 = vector.load %arg1[%c0_16, %c0_17, %c20] : memref<1x8x432xf32, #tpu.memory_space<vmem>>, vector<1x8x384xf32>
    %16 = vector.shape_cast %15 : vector<1x8x384xf32> to vector<8x384xf32>
    %c40 = arith.constant 40 : index
    %c0_18 = arith.constant 0 : index
    %17 = vector.load %arg7[%c40, %c0_18] : memref<72x384xf32, #tpu.memory_space<vmem>>, vector<8x384xf32>
    tpu.vector_store %arg7[%c40, %c0_18], %16 {strides = array<i32>} : memref<72x384xf32, #tpu.memory_space<vmem>>, vector<8x384xf32>,
    %c0_19 = arith.constant 0 : index
    %c0_20 = arith.constant 0 : index
    %c36 = arith.constant 36 : index
    %18 = vector.load %arg1[%c0_19, %c0_20, %c36] : memref<1x8x432xf32, #tpu.memory_space<vmem>>, vector<1x8x384xf32>
    %19 = vector.shape_cast %18 : vector<1x8x384xf32> to vector<8x384xf32>
    %c48 = arith.constant 48 : index
    %c0_21 = arith.constant 0 : index
    %20 = vector.load %arg7[%c48, %c0_21] : memref<72x384xf32, #tpu.memory_space<vmem>>, vector<8x384xf32>
    tpu.vector_store %arg7[%c48, %c0_21], %19 {strides = array<i32>} : memref<72x384xf32, #tpu.memory_space<vmem>>, vector<8x384xf32>,
    %c0_22 = arith.constant 0 : index
    %c0_23 = arith.constant 0 : index
    %c37 = arith.constant 37 : index
    %21 = vector.load %arg1[%c0_22, %c0_23, %c37] : memref<1x8x432xf32, #tpu.memory_space<vmem>>, vector<1x8x384xf32>
    %22 = vector.shape_cast %21 : vector<1x8x384xf32> to vector<8x384xf32>
    %c56 = arith.constant 56 : index
    %c0_24 = arith.constant 0 : index
    %23 = vector.load %arg7[%c56, %c0_24] : memref<72x384xf32, #tpu.memory_space<vmem>>, vector<8x384xf32>
    tpu.vector_store %arg7[%c56, %c0_24], %22 {strides = array<i32>} : memref<72x384xf32, #tpu.memory_space<vmem>>, vector<8x384xf32>,
    %c0_25 = arith.constant 0 : index
    %c0_26 = arith.constant 0 : index
    %c38 = arith.constant 38 : index
    %24 = vector.load %arg1[%c0_25, %c0_26, %c38] : memref<1x8x432xf32, #tpu.memory_space<vmem>>, vector<1x8x384xf32>
    %25 = vector.shape_cast %24 : vector<1x8x384xf32> to vector<8x384xf32>
    %c64 = arith.constant 64 : index
    %c0_27 = arith.constant 0 : index
    %26 = vector.load %arg7[%c64, %c0_27] : memref<72x384xf32, #tpu.memory_space<vmem>>, vector<8x384xf32>
    tpu.vector_store %arg7[%c64, %c0_27], %25 {strides = array<i32>} : memref<72x384xf32, #tpu.memory_space<vmem>>, vector<8x384xf32>,
    %c0_28 = arith.constant 0 : index
    %c0_29 = arith.constant 0 : index
    %27 = vector.load %arg2[%c0_28, %c0_29] : memref<16x72xf32, #tpu.memory_space<vmem>>, vector<16x72xf32>
    %c0_30 = arith.constant 0 : index
    %c0_31 = arith.constant 0 : index
    %28 = vector.load %arg7[%c0_30, %c0_31] : memref<72x384xf32, #tpu.memory_space<vmem>>, vector<72x384xf32>
    %cst = arith.constant dense<0.000000e+00> : vector<16x384xf32>
    %29 = tpu.matmul %27, %28, %cst {dimension_numbers = #tpu.dot_dimension_numbers<[1], [0], [0], [1], [0, 0, 1, 1], [], []>} : vector<16x72xf32>, vector<72x384xf32>, vector<16x384xf32> -> vector<16x384xf32>
    %30 = vector.extract_strided_slice %29 {offsets = [0, 0], sizes = [8, 384], strides = [1, 1]} : vector<16x384xf32> to vector<8x384xf32>
    %31 = vector.extract_strided_slice %29 {offsets = [8, 0], sizes = [8, 384], strides = [1, 1]} : vector<16x384xf32> to vector<8x384xf32>
    %cst_32 = arith.constant 0.000000e+00 : f32
    %32 = vector.broadcast %cst_32 : f32 to vector<8x384xf32>
    %33 = arith.maximumf %30, %32 : vector<8x384xf32>
    %c0_33 = arith.constant 0 : index
    %c0_34 = arith.constant 0 : index
    %34 = vector.load %arg4[%c0_33, %c0_34] : memref<8x1xf32, #tpu.memory_space<vmem>>, vector<8x1xf32>
    %35 = vector.broadcast %34 : vector<8x1xf32> to vector<8x384xf32>
    %36 = arith.mulf %33, %35 : vector<8x384xf32>
    %c0_35 = arith.constant 0 : index
    %c0_36 = arith.constant 0 : index
    %37 = vector.load %arg5[%c0_35, %c0_36] : memref<8x1xf32, #tpu.memory_space<vmem>>, vector<8x1xf32>
    %38 = vector.broadcast %37 : vector<8x1xf32> to vector<8x384xf32>
    %39 = arith.addf %36, %38 : vector<8x384xf32>
    %40 = arith.addf %31, %39 : vector<8x384xf32>
    %c0_37 = arith.constant 0 : index
    %c0_38 = arith.constant 0 : index
    %41 = vector.load %arg8[%c0_37, %c0_38] : memref<8x384xf32, #tpu.memory_space<vmem>>, vector<8x384xf32>
    tpu.vector_store %arg8[%c0_37, %c0_38], %40 {strides = array<i32>} : memref<8x384xf32, #tpu.memory_space<vmem>>, vector<8x384xf32>,
    %c0_39 = arith.constant 0 : index
    %c0_40 = arith.constant 0 : index
    %42 = vector.load %arg8[%c0_39, %c0_40] : memref<8x384xf32, #tpu.memory_space<vmem>>, vector<8x256xf32>
    %c0_41 = arith.constant 0 : index
    %c0_42 = arith.constant 0 : index
    %43 = vector.load %arg9[%c0_41, %c0_42] : memref<72x256xf32, #tpu.memory_space<vmem>>, vector<8x256xf32>
    tpu.vector_store %arg9[%c0_41, %c0_42], %42 {strides = array<i32>} : memref<72x256xf32, #tpu.memory_space<vmem>>, vector<8x256xf32>,
    %c0_43 = arith.constant 0 : index
    %c1_44 = arith.constant 1 : index
    %44 = vector.load %arg8[%c0_43, %c1_44] : memref<8x384xf32, #tpu.memory_space<vmem>>, vector<8x256xf32>
    %c8_45 = arith.constant 8 : index
    %c0_46 = arith.constant 0 : index
    %45 = vector.load %arg9[%c8_45, %c0_46] : memref<72x256xf32, #tpu.memory_space<vmem>>, vector<8x256xf32>
    tpu.vector_store %arg9[%c8_45, %c0_46], %44 {strides = array<i32>} : memref<72x256xf32, #tpu.memory_space<vmem>>, vector<8x256xf32>,
    %c0_47 = arith.constant 0 : index
    %c2_48 = arith.constant 2 : index
    %46 = vector.load %arg8[%c0_47, %c2_48] : memref<8x384xf32, #tpu.memory_space<vmem>>, vector<8x256xf32>
    %c16_49 = arith.constant 16 : index
    %c0_50 = arith.constant 0 : index
    %47 = vector.load %arg9[%c16_49, %c0_50] : memref<72x256xf32, #tpu.memory_space<vmem>>, vector<8x256xf32>
    tpu.vector_store %arg9[%c16_49, %c0_50], %46 {strides = array<i32>} : memref<72x256xf32, #tpu.memory_space<vmem>>, vector<8x256xf32>,
    %c0_51 = arith.constant 0 : index
    %c18_52 = arith.constant 18 : index
    %48 = vector.load %arg8[%c0_51, %c18_52] : memref<8x384xf32, #tpu.memory_space<vmem>>, vector<8x256xf32>
    %c24_53 = arith.constant 24 : index
    %c0_54 = arith.constant 0 : index
    %49 = vector.load %arg9[%c24_53, %c0_54] : memref<72x256xf32, #tpu.memory_space<vmem>>, vector<8x256xf32>
    tpu.vector_store %arg9[%c24_53, %c0_54], %48 {strides = array<i32>} : memref<72x256xf32, #tpu.memory_space<vmem>>, vector<8x256xf32>,
    %c0_55 = arith.constant 0 : index
    %c19_56 = arith.constant 19 : index
    %50 = vector.load %arg8[%c0_55, %c19_56] : memref<8x384xf32, #tpu.memory_space<vmem>>, vector<8x256xf32>
    %c32_57 = arith.constant 32 : index
    %c0_58 = arith.constant 0 : index
    %51 = vector.load %arg9[%c32_57, %c0_58] : memref<72x256xf32, #tpu.memory_space<vmem>>, vector<8x256xf32>
    tpu.vector_store %arg9[%c32_57, %c0_58], %50 {strides = array<i32>} : memref<72x256xf32, #tpu.memory_space<vmem>>, vector<8x256xf32>,
    %c0_59 = arith.constant 0 : index
    %c20_60 = arith.constant 20 : index
    %52 = vector.load %arg8[%c0_59, %c20_60] : memref<8x384xf32, #tpu.memory_space<vmem>>, vector<8x256xf32>
    %c40_61 = arith.constant 40 : index
    %c0_62 = arith.constant 0 : index
    %53 = vector.load %arg9[%c40_61, %c0_62] : memref<72x256xf32, #tpu.memory_space<vmem>>, vector<8x256xf32>
    tpu.vector_store %arg9[%c40_61, %c0_62], %52 {strides = array<i32>} : memref<72x256xf32, #tpu.memory_space<vmem>>, vector<8x256xf32>,
    %c0_63 = arith.constant 0 : index
    %c36_64 = arith.constant 36 : index
    %54 = vector.load %arg8[%c0_63, %c36_64] : memref<8x384xf32, #tpu.memory_space<vmem>>, vector<8x256xf32>
    %c48_65 = arith.constant 48 : index
    %c0_66 = arith.constant 0 : index
    %55 = vector.load %arg9[%c48_65, %c0_66] : memref<72x256xf32, #tpu.memory_space<vmem>>, vector<8x256xf32>
    tpu.vector_store %arg9[%c48_65, %c0_66], %54 {strides = array<i32>} : memref<72x256xf32, #tpu.memory_space<vmem>>, vector<8x256xf32>,
    %c0_67 = arith.constant 0 : index
    %c37_68 = arith.constant 37 : index
    %56 = vector.load %arg8[%c0_67, %c37_68] : memref<8x384xf32, #tpu.memory_space<vmem>>, vector<8x256xf32>
    %c56_69 = arith.constant 56 : index
    %c0_70 = arith.constant 0 : index
    %57 = vector.load %arg9[%c56_69, %c0_70] : memref<72x256xf32, #tpu.memory_space<vmem>>, vector<8x256xf32>
    tpu.vector_store %arg9[%c56_69, %c0_70], %56 {strides = array<i32>} : memref<72x256xf32, #tpu.memory_space<vmem>>, vector<8x256xf32>,
    %c0_71 = arith.constant 0 : index
    %c38_72 = arith.constant 38 : index
    %58 = vector.load %arg8[%c0_71, %c38_72] : memref<8x384xf32, #tpu.memory_space<vmem>>, vector<8x256xf32>
    %c64_73 = arith.constant 64 : index
    %c0_74 = arith.constant 0 : index
    %59 = vector.load %arg9[%c64_73, %c0_74] : memref<72x256xf32, #tpu.memory_space<vmem>>, vector<8x256xf32>
    tpu.vector_store %arg9[%c64_73, %c0_74], %58 {strides = array<i32>} : memref<72x256xf32, #tpu.memory_space<vmem>>, vector<8x256xf32>,
    %c0_75 = arith.constant 0 : index
    %c0_76 = arith.constant 0 : index
    %60 = vector.load %arg3[%c0_75, %c0_76] : memref<8x72xf32, #tpu.memory_space<vmem>>, vector<8x72xf32>
    %c0_77 = arith.constant 0 : index
    %c0_78 = arith.constant 0 : index
    %61 = vector.load %arg9[%c0_77, %c0_78] : memref<72x256xf32, #tpu.memory_space<vmem>>, vector<72x256xf32>
    %cst_79 = arith.constant dense<0.000000e+00> : vector<8x256xf32>
    %62 = tpu.matmul %60, %61, %cst_79 {dimension_numbers = #tpu.dot_dimension_numbers<[1], [0], [0], [1], [0, 0, 1, 1], [], []>} : vector<8x72xf32>, vector<72x256xf32>, vector<8x256xf32> -> vector<8x256xf32>
    %c0_80 = arith.constant 0 : index
    %c0_81 = arith.constant 0 : index
    %c0_82 = arith.constant 0 : index
    %63 = vector.load %arg6[%c0_80, %c0_81, %c0_82] : memref<1x8x256xf32, #tpu.memory_space<vmem>>, vector<1x8x256xf32>
    %64 = vector.shape_cast %63 : vector<1x8x256xf32> to vector<8x256xf32>
    %65 = vector.shape_cast %62 : vector<8x256xf32> to vector<1x8x256xf32>
    tpu.vector_store %arg6[%c0_80, %c0_81, %c0_82], %65 {strides = array<i32>} : memref<1x8x256xf32, #tpu.memory_space<vmem>>, vector<1x8x256xf32>,
    return
  }
  func.func @transform_0(%arg0: i32) -> (i32, i32, i32) {
    %c0_i32 = arith.constant 0 : i32
    %c0_i32_0 = arith.constant 0 : i32
    %c0_i32_1 = arith.constant 0 : i32
    return %arg0, %c0_i32, %c0_i32_0 : i32, i32, i32
  }
  func.func @transform_1(%arg0: i32) -> (i32, i32) {
    %c0_i32 = arith.constant 0 : i32
    %c0_i32_0 = arith.constant 0 : i32
    %c0_i32_1 = arith.constant 0 : i32
    return %c0_i32, %c0_i32_0 : i32, i32
  }
  func.func @transform_2(%arg0: i32) -> (i32, i32) {
    %c0_i32 = arith.constant 0 : i32
    %c0_i32_0 = arith.constant 0 : i32
    %c0_i32_1 = arith.constant 0 : i32
    return %c0_i32, %c0_i32_0 : i32, i32
  }
  func.func @transform_3(%arg0: i32) -> (i32, i32) {
    %c0_i32 = arith.constant 0 : i32
    %c0_i32_0 = arith.constant 0 : i32
    %c0_i32_1 = arith.constant 0 : i32
    return %c0_i32, %c0_i32_0 : i32, i32
  }
  func.func @transform_4(%arg0: i32) -> (i32, i32) {
    %c0_i32 = arith.constant 0 : i32
    %c0_i32_0 = arith.constant 0 : i32
    %c0_i32_1 = arith.constant 0 : i32
    return %c0_i32, %c0_i32_0 : i32, i32
  }
  func.func @transform_5(%arg0: i32) -> (i32, i32, i32) {
    %c0_i32 = arith.constant 0 : i32
    %c0_i32_0 = arith.constant 0 : i32
    %c0_i32_1 = arith.constant 0 : i32
    return %arg0, %c0_i32, %c0_i32_0 : i32, i32, i32
  }
}

</mosaic_0001>

<llo_original>
// kernel: input_block_forward.1
$region0: #{input_block_forward.1}
  #allocation0 [shape = 'u32[]', space=smem, size = 0x4, offset = 0x4, fixed_abs, tag = 'smem constant byte address 0x4 - core index']
  #allocation1 [shape = 'u32[144,128]{1,0:T(1,128)}', space=vmem, size = 0x12000, scoped, tag = 'internal scratch']
  #allocation2 [shape = 'f32[72,384]{1,0:T(8,128)}', space=vmem, size = 0x1b000, scoped, tag = 'scratch operand']
  #allocation3 [shape = 'f32[8,384]{1,0:T(8,128)}', space=vmem, size = 0x3000, scoped, tag = 'scratch operand']
  #allocation4 [shape = 'f32[72,256]{1,0:T(8,128)}', space=vmem, size = 0x12000, scoped, tag = 'scratch operand']
  %s0 = inlined_call_operand.vmem [shape: f32[2,8,432], index: 0, kind: input, shape index: {}]
  %s1 = inlined_call_operand.vmem [shape: f32[16,72], index: 1, kind: input, shape index: {}]
  %s2 = inlined_call_operand.vmem [shape: f32[8,72], index: 2, kind: input, shape index: {}]
  %s3 = inlined_call_operand.vmem [shape: f32[8,1], index: 3, kind: input, shape index: {}]
  %s4 = inlined_call_operand.vmem [shape: f32[8,1], index: 4, kind: input, shape index: {}]
  %s5 = inlined_call_operand.vmem [shape: f32[2,8,256], index: 5, kind: output, shape index: {}]
  %s6 = sld [smem:[#allocation0]]
  $region53: #{input_block_forward.1} parent=0
    _
  %s8 = ssub.s32 1, %s6
  %s9 = scalar_select 0, %s8, %s6
  loop: start=0, step=1, limit=4
  $region2: #{input_block_forward.1} parent=0 // loop_pre_header
    _
  $region3: #{input_block_forward.1} parent=0 // loop_header
    %s11 = sphi 0, %s15
    %p12 = scmp.ge.s32.totalorder %s11, 4
    %s21 = sphi 0, %s23
    %s24 = sphi 0, %s21
    %s25 = sphi 0, %s24
    %s41 = sphi 0, %s25
    %s45 = sphi 0, %s45
    %s47 = sphi 0, %s45
    %s48 = sphi 0, %s47
    %s62 = sphi 0, %s48
    %s66 = sphi 0, %s66
    %s68 = sphi 0, %s66
    %s69 = sphi 0, %s68
    %s83 = sphi 0, %s69
    %s87 = sphi 0, %s87
    %s89 = sphi 0, %s87
    %s90 = sphi 0, %s89
    %s104 = sphi 0, %s90
    %s108 = sphi 0, %s108
    %s110 = sphi 0, %s108
    %s111 = sphi 0, %s110
    %s125 = sphi 0, %s111
    %s131 = sphi 0, %s133
    %s134 = sphi 0, %s131
    %s135 = sphi 0, %s134
    %s151 = sphi 0, %s135
  $region4: #{input_block_forward.1} parent=0 // loop_header_branch
    %14 = sbr.rel (%p12) target = $region8
  $region5: #{input_block_forward.1} parent=0 // loop_body
    %s16 = ssub.s32 %s11, 1
    %s17 = ssub.s32 %s11, 2
    %s18 = sadd.s32 %s11, 1
    %s19 = ssub.s32 %s11, %s18
    %p20 = scmp.eq.s32.totalorder %s19, 0
    %s22 = sadd.s32 %s21, 1
    %s23 = scalar_select %p20, %s21, %s22
    %p26 = pneg %p20
    %p27 = scmp.eq.s32.totalorder %s11, 1
    %p28 = por %p26, %p27
    %p29 = scmp.ne.s32.totalorder %s21, %s24
    %p30 = scmp.eq.s32.totalorder %s11, 0
    %p31 = por %p29, %p30
    %p32 = scmp.ne.s32.totalorder %s21, %s24
    %p33 = scmp.eq.s32.totalorder %s16, 1
    %p34 = por %p32, %p33
    %p35 = scmp.ne.s32.totalorder %s24, %s25
    %p36 = scmp.eq.s32.totalorder %s16, 0
    %p37 = por %p35, %p36
    %p38 = scmp.ne.s32.totalorder %s24, %s25
    %p39 = scmp.eq.s32.totalorder %s17, 1
    %p40 = por %p38, %p39
    %p42 = scmp.ne.s32.totalorder %s25, %s41
    %p43 = scmp.eq.s32.totalorder %s17, 0
    %p44 = por %p42, %p43
    %s46 = sadd.s32 %s45, 1
    %p49 = scmp.eq.s32.totalorder %s11, 1
    %p50 = scmp.ne.s32.totalorder %s45, %s47
    %p51 = scmp.eq.s32.totalorder %s11, 0
    %p52 = por %p50, %p51
    %p53 = scmp.ne.s32.totalorder %s45, %s47
    %p54 = scmp.eq.s32.totalorder %s16, 1
    %p55 = por %p53, %p54
    %p56 = scmp.ne.s32.totalorder %s47, %s48
    %p57 = scmp.eq.s32.totalorder %s16, 0
    %p58 = por %p56, %p57
    %p59 = scmp.ne.s32.totalorder %s47, %s48
    %p60 = scmp.eq.s32.totalorder %s17, 1
    %p61 = por %p59, %p60
    %p63 = scmp.ne.s32.totalorder %s48, %s62
    %p64 = scmp.eq.s32.totalorder %s17, 0
    %p65 = por %p63, %p64
    %s67 = sadd.s32 %s66, 1
    %p70 = scmp.eq.s32.totalorder %s11, 1
    %p71 = scmp.ne.s32.totalorder %s66, %s68
    %p72 = scmp.eq.s32.totalorder %s11, 0
    %p73 = por %p71, %p72
    %p74 = scmp.ne.s32.totalorder %s66, %s68
    %p75 = scmp.eq.s32.totalorder %s16, 1
    %p76 = por %p74, %p75
    %p77 = scmp.ne.s32.totalorder %s68, %s69
    %p78 = scmp.eq.s32.totalorder %s16, 0
    %p79 = por %p77, %p78
    %p80 = scmp.ne.s32.totalorder %s68, %s69
    %p81 = scmp.eq.s32.totalorder %s17, 1
    %p82 = por %p80, %p81
    %p84 = scmp.ne.s32.totalorder %s69, %s83
    %p85 = scmp.eq.s32.totalorder %s17, 0
    %p86 = por %p84, %p85
    %s88 = sadd.s32 %s87, 1
    %p91 = scmp.eq.s32.totalorder %s11, 1
    %p92 = scmp.ne.s32.totalorder %s87, %s89
    %p93 = scmp.eq.s32.totalorder %s11, 0
    %p94 = por %p92, %p93
    %p95 = scmp.ne.s32.totalorder %s87, %s89
    %p96 = scmp.eq.s32.totalorder %s16, 1
    %p97 = por %p95, %p96
    %p98 = scmp.ne.s32.totalorder %s89, %s90
    %p99 = scmp.eq.s32.totalorder %s16, 0
    %p100 = por %p98, %p99
    %p101 = scmp.ne.s32.totalorder %s89, %s90
    %p102 = scmp.eq.s32.totalorder %s17, 1
    %p103 = por %p101, %p102
    %p105 = scmp.ne.s32.totalorder %s90, %s104
    %p106 = scmp.eq.s32.totalorder %s17, 0
    %p107 = por %p105, %p106
    %s109 = sadd.s32 %s108, 1
    %p112 = scmp.eq.s32.totalorder %s11, 1
    %p113 = scmp.ne.s32.totalorder %s108, %s110
    %p114 = scmp.eq.s32.totalorder %s11, 0
    %p115 = por %p113, %p114
    %p116 = scmp.ne.s32.totalorder %s108, %s110
    %p117 = scmp.eq.s32.totalorder %s16, 1
    %p118 = por %p116, %p117
    %p119 = scmp.ne.s32.totalorder %s110, %s111
    %p120 = scmp.eq.s32.totalorder %s16, 0
    %p121 = por %p119, %p120
    %p122 = scmp.ne.s32.totalorder %s110, %s111
    %p123 = scmp.eq.s32.totalorder %s17, 1
    %p124 = por %p122, %p123
    %p126 = scmp.ne.s32.totalorder %s111, %s125
    %p127 = scmp.eq.s32.totalorder %s17, 0
    %p128 = por %p126, %p127
    %s129 = ssub.s32 %s11, %s18
    %p130 = scmp.eq.s32.totalorder %s129, 0
    %s132 = sadd.s32 %s131, 1
    %s133 = scalar_select %p130, %s131, %s132
    %p136 = pneg %p130
    %p137 = scmp.eq.s32.totalorder %s11, 1
    %p138 = por %p136, %p137
    %p139 = scmp.ne.s32.totalorder %s131, %s134
    %p140 = scmp.eq.s32.totalorder %s11, 0
    %p141 = por %p139, %p140
    %p142 = scmp.ne.s32.totalorder %s131, %s134
    %p143 = scmp.eq.s32.totalorder %s16, 1
    %p144 = por %p142, %p143
    %p145 = scmp.ne.s32.totalorder %s134, %s135
    %p146 = scmp.eq.s32.totalorder %s16, 0
    %p147 = por %p145, %p146
    %p148 = scmp.ne.s32.totalorder %s134, %s135
    %p149 = scmp.eq.s32.totalorder %s17, 1
    %p150 = por %p148, %p149
    %p152 = scmp.ne.s32.totalorder %s135, %s151
    %p153 = scmp.eq.s32.totalorder %s17, 0
    %p154 = por %p152, %p153
    %p155 = scmp.le.s32.totalorder 1, %s11
    %p156 = scmp.lt.s32.totalorder %s11, 3
    %p157 = pnand %p155, %p156
    %p158 = pneg %p157
    // Predicated region
    $region9: #{input_block_forward.1} parent=5 // pred_check
      _
    $region10: #{input_block_forward.1} parent=5 // pred_check_branch
      %160 = sbr.rel (%p157) target = $region12
    $region11: #{input_block_forward.1} parent=5 // pred_region
      %s161 = ssub.s32 %s11, 1
      // Predicated region
      $region13: #{input_block_forward.1} parent=11 // pred_check
        %p162 = pneg %p58
      $region14: #{input_block_forward.1} parent=11 // pred_check_branch
        %164 = sbr.rel (%p162) target = $region16
      $region15: #{input_block_forward.1} parent=11 // pred_region
        _
      $region16: #{input_block_forward.1} parent=11 // pred_fallthru
        _
      // Predicated region
      $region17: #{input_block_forward.1} parent=11 // pred_check
        %p165 = pneg %p79
      $region18: #{input_block_forward.1} parent=11 // pred_check_branch
        %167 = sbr.rel (%p165) target = $region20
      $region19: #{input_block_forward.1} parent=11 // pred_region
        _
      $region20: #{input_block_forward.1} parent=11 // pred_fallthru
        _
      // Predicated region
      $region21: #{input_block_forward.1} parent=11 // pred_check
        %p168 = pneg %p100
      $region22: #{input_block_forward.1} parent=11 // pred_check_branch
        %170 = sbr.rel (%p168) target = $region24
      $region23: #{input_block_forward.1} parent=11 // pred_region
        _
      $region24: #{input_block_forward.1} parent=11 // pred_fallthru
        _
      // Predicated region
      $region25: #{input_block_forward.1} parent=11 // pred_check
        %p171 = pneg %p121
      $region26: #{input_block_forward.1} parent=11 // pred_check_branch
        %173 = sbr.rel (%p171) target = $region28
      $region27: #{input_block_forward.1} parent=11 // pred_region
        _
      $region28: #{input_block_forward.1} parent=11 // pred_fallthru
        _
    $region12: #{input_block_forward.1} parent=5 // pred_fallthru
      _
    %p174 = scmp.lt.s32.totalorder %s11, 2
    // Predicated region
    $region29: #{input_block_forward.1} parent=5 // pred_check
      %p175 = pneg %p174
    $region30: #{input_block_forward.1} parent=5 // pred_check_branch
      %177 = sbr.rel (%p175) target = $region32
    $region31: #{input_block_forward.1} parent=5 // pred_region
      // Predicated region
      $region33: #{input_block_forward.1} parent=31 // pred_check
        %p178 = pneg %p31
      $region34: #{input_block_forward.1} parent=31 // pred_check_branch
        %180 = sbr.rel (%p178) target = $region36
      $region35: #{input_block_forward.1} parent=31 // pred_region
        %p181 = scmp.lt.s32.totalorder %s11, 1
        %s182 = scalar_select %p181, %s11, 1
        %s183 = smul.addr %s182, 4
        %s184 = smul.addr %s183, 8
        %s185 = scalar_lea.vmem %s0, %s184
      $region36: #{input_block_forward.1} parent=31 // pred_fallthru
        _
    $region32: #{input_block_forward.1} parent=5 // pred_fallthru
      _
    %p186 = scmp.le.s32.totalorder 1, %s11
    %p187 = scmp.lt.s32.totalorder %s11, 3
    %p188 = pnand %p186, %p187
    %p189 = pneg %p188
    // Predicated region
    $region37: #{input_block_forward.1} parent=5 // pred_check
      _
    $region38: #{input_block_forward.1} parent=5 // pred_check_branch
      %191 = sbr.rel (%p188) target = $region40
    $region39: #{input_block_forward.1} parent=5 // pred_region
      %s192 = ssub.s32 %s11, 1
      %p193 = scmp.lt.s32.totalorder %s16, 1
      %s194 = scalar_select %p193, %s16, 1
      %s195 = smul.addr %s194, 4
      %s196 = smul.addr %s195, 8
      %s197 = scalar_lea.vmem %s0, %s196
      %p198 = pneg %p37
      %p199 = pneg %p34
      %p200 = pneg %p58
      %p201 = pneg %p55
      %p202 = pneg %p79
      %p203 = pneg %p76
      %p204 = pneg %p100
      %p205 = pneg %p97
      %p206 = pneg %p121
      %p207 = pneg %p118
      %p208 = pneg %p147
      %p209 = pneg %p144
      %p210 = scmp.lt.s32.totalorder %s16, 1
      %s211 = scalar_select %p210, %s16, 1
      %s212 = smul.addr %s211, 2
      %s213 = smul.addr %s212, 8
      %s214 = scalar_lea.vmem %s5, %s213
      %p215 = scmp.lt.s32.totalorder %s16, 1
      %s216 = scalar_select %p215, %s16, 1
      %s217 = smul.addr %s216, 4
      %s218 = smul.addr %s217, 8
      %s219 = scalar_lea.vmem %s0, %s218
      %p220 = scmp.lt.s32.totalorder %s16, 1
      %s221 = scalar_select %p220, %s16, 1
      %s222 = smul.addr %s221, 2
      %s223 = smul.addr %s222, 8
      %s224 = scalar_lea.vmem %s5, %s223
      %v225 = vld [vmem:[%s219] sm:$0xff]
      %v226 = vld [vmem:[%s219 + $0x8] sm:$0xff]
      %v227 = vld [vmem:[%s219 + $0x10] sm:$0xff]
      %228 = vst [vmem:[#allocation2] sm:$0xff] %v225
      %229 = vst [vmem:[#allocation2 + $0x8] sm:$0xff] %v226
      %230 = vst [vmem:[#allocation2 + $0x10] sm:$0xff] %v227
      %v231 = vld [vmem:[%s219] sm:$0xff]
      %v232 = vld [vmem:[%s219 + $0x8] sm:$0xff]
      %v233 = vld [vmem:[%s219 + $0x10] sm:$0xff]
      %v234 = vld [vmem:[%s219 + $0x18] sm:$0xff]
      %239 = vrot.lane.b32.xlu0 %v231, 127
      %v240 = vpop.permute.xlu0 %239
      %241 = vrot.lane.b32.xlu0 %v232, 127
      %v242 = vpop.permute.xlu0 %241
      %243 = vrot.lane.b32.xlu0 %v233, 127
      %v244 = vpop.permute.xlu0 %243
      %245 = vrot.lane.b32.xlu0 %v234, 127
      %v246 = vpop.permute.xlu0 %245
      %vm247 = vcmask 1039360
      %v248 = vsel %vm247, %v240, %v242
      %v249 = vsel %vm247, %v242, %v244
      %v250 = vsel %vm247, %v244, %v246
      %254 = vst [vmem:[#allocation2 + $0x18] sm:$0xff] %v248
      %255 = vst [vmem:[#allocation2 + $0x20] sm:$0xff] %v249
      %256 = vst [vmem:[#allocation2 + $0x28] sm:$0xff] %v250
      %v257 = vld [vmem:[%s219] sm:$0xff]
      %v258 = vld [vmem:[%s219 + $0x8] sm:$0xff]
      %v259 = vld [vmem:[%s219 + $0x10] sm:$0xff]
      %v260 = vld [vmem:[%s219 + $0x18] sm:$0xff]
      %265 = vrot.lane.b32.xlu0 %v257, 126
      %v266 = vpop.permute.xlu0 %265
      %267 = vrot.lane.b32.xlu0 %v258, 126
      %v268 = vpop.permute.xlu0 %267
      %269 = vrot.lane.b32.xlu0 %v259, 126
      %v270 = vpop.permute.xlu0 %269
      %271 = vrot.lane.b32.xlu0 %v260, 126
      %v272 = vpop.permute.xlu0 %271
      %vm273 = vcmask 1031168
      %v274 = vsel %vm273, %v266, %v268
      %v275 = vsel %vm273, %v268, %v270
      %v276 = vsel %vm273, %v270, %v272
      %280 = vst [vmem:[#allocation2 + $0x30] sm:$0xff] %v274
      %281 = vst [vmem:[#allocation2 + $0x38] sm:$0xff] %v275
      %282 = vst [vmem:[#allocation2 + $0x40] sm:$0xff] %v276
      %v283 = vld [vmem:[%s219] sm:$0xff]
      %v284 = vld [vmem:[%s219 + $0x8] sm:$0xff]
      %v285 = vld [vmem:[%s219 + $0x10] sm:$0xff]
      %v286 = vld [vmem:[%s219 + $0x18] sm:$0xff]
      %291 = vrot.lane.b32.xlu0 %v283, 110
      %v292 = vpop.permute.xlu0 %291
      %293 = vrot.lane.b32.xlu0 %v284, 110
      %v294 = vpop.permute.xlu0 %293
      %295 = vrot.lane.b32.xlu0 %v285, 110
      %v296 = vpop.permute.xlu0 %295
      %297 = vrot.lane.b32.xlu0 %v286, 110
      %v298 = vpop.permute.xlu0 %297
      %vm299 = vcmask 900096
      %v300 = vsel %vm299, %v292, %v294
      %v301 = vsel %vm299, %v294, %v296
      %v302 = vsel %vm299, %v296, %v298
      %306 = vst [vmem:[#allocation2 + $0x48] sm:$0xff] %v300
      %307 = vst [vmem:[#allocation2 + $0x50] sm:$0xff] %v301
      %308 = vst [vmem:[#allocation2 + $0x58] sm:$0xff] %v302
      %v309 = vld [vmem:[%s219] sm:$0xff]
      %v310 = vld [vmem:[%s219 + $0x8] sm:$0xff]
      %v311 = vld [vmem:[%s219 + $0x10] sm:$0xff]
      %v312 = vld [vmem:[%s219 + $0x18] sm:$0xff]
      %317 = vrot.lane.b32.xlu0 %v309, 109
      %v318 = vpop.permute.xlu0 %317
      %319 = vrot.lane.b32.xlu0 %v310, 109
      %v320 = vpop.permute.xlu0 %319
      %321 = vrot.lane.b32.xlu0 %v311, 109
      %v322 = vpop.permute.xlu0 %321
      %323 = vrot.lane.b32.xlu0 %v312, 109
      %v324 = vpop.permute.xlu0 %323
      %vm325 = vcmask 891904
      %v326 = vsel %vm325, %v318, %v320
      %v327 = vsel %vm325, %v320, %v322
      %v328 = vsel %vm325, %v322, %v324
      %332 = vst [vmem:[#allocation2 + $0x60] sm:$0xff] %v326
      %333 = vst [vmem:[#allocation2 + $0x68] sm:$0xff] %v327
      %334 = vst [vmem:[#allocation2 + $0x70] sm:$0xff] %v328
      %v335 = vld [vmem:[%s219] sm:$0xff]
      %v336 = vld [vmem:[%s219 + $0x8] sm:$0xff]
      %v337 = vld [vmem:[%s219 + $0x10] sm:$0xff]
      %v338 = vld [vmem:[%s219 + $0x18] sm:$0xff]
      %343 = vrot.lane.b32.xlu0 %v335, 108
      %v344 = vpop.permute.xlu0 %343
      %345 = vrot.lane.b32.xlu0 %v336, 108
      %v346 = vpop.permute.xlu0 %345
      %347 = vrot.lane.b32.xlu0 %v337, 108
      %v348 = vpop.permute.xlu0 %347
      %349 = vrot.lane.b32.xlu0 %v338, 108
      %v350 = vpop.permute.xlu0 %349
      %vm351 = vcmask 883712
      %v352 = vsel %vm351, %v344, %v346
      %v353 = vsel %vm351, %v346, %v348
      %v354 = vsel %vm351, %v348, %v350
      %358 = vst [vmem:[#allocation2 + $0x78] sm:$0xff] %v352
      %359 = vst [vmem:[#allocation2 + $0x80] sm:$0xff] %v353
      %360 = vst [vmem:[#allocation2 + $0x88] sm:$0xff] %v354
      %v361 = vld [vmem:[%s219] sm:$0xff]
      %v362 = vld [vmem:[%s219 + $0x8] sm:$0xff]
      %v363 = vld [vmem:[%s219 + $0x10] sm:$0xff]
      %v364 = vld [vmem:[%s219 + $0x18] sm:$0xff]
      %369 = vrot.lane.b32.xlu0 %v361, 92
      %v370 = vpop.permute.xlu0 %369
      %371 = vrot.lane.b32.xlu0 %v362, 92
      %v372 = vpop.permute.xlu0 %371
      %373 = vrot.lane.b32.xlu0 %v363, 92
      %v374 = vpop.permute.xlu0 %373
      %375 = vrot.lane.b32.xlu0 %v364, 92
      %v376 = vpop.permute.xlu0 %375
      %vm377 = vcmask 752640
      %v378 = vsel %vm377, %v370, %v372
      %v379 = vsel %vm377, %v372, %v374
      %v380 = vsel %vm377, %v374, %v376
      %384 = vst [vmem:[#allocation2 + $0x90] sm:$0xff] %v378
      %385 = vst [vmem:[#allocation2 + $0x98] sm:$0xff] %v379
      %386 = vst [vmem:[#allocation2 + $0xa0] sm:$0xff] %v380
      %v387 = vld [vmem:[%s219] sm:$0xff]
      %v388 = vld [vmem:[%s219 + $0x8] sm:$0xff]
      %v389 = vld [vmem:[%s219 + $0x10] sm:$0xff]
      %v390 = vld [vmem:[%s219 + $0x18] sm:$0xff]
      %395 = vrot.lane.b32.xlu0 %v387, 91
      %v396 = vpop.permute.xlu0 %395
      %397 = vrot.lane.b32.xlu0 %v388, 91
      %v398 = vpop.permute.xlu0 %397
      %399 = vrot.lane.b32.xlu0 %v389, 91
      %v400 = vpop.permute.xlu0 %399
      %401 = vrot.lane.b32.xlu0 %v390, 91
      %v402 = vpop.permute.xlu0 %401
      %vm403 = vcmask 744448
      %v404 = vsel %vm403, %v396, %v398
      %v405 = vsel %vm403, %v398, %v400
      %v406 = vsel %vm403, %v400, %v402
      %410 = vst [vmem:[#allocation2 + $0xa8] sm:$0xff] %v404
      %411 = vst [vmem:[#allocation2 + $0xb0] sm:$0xff] %v405
      %412 = vst [vmem:[#allocation2 + $0xb8] sm:$0xff] %v406
      %v413 = vld [vmem:[%s219] sm:$0xff]
      %v414 = vld [vmem:[%s219 + $0x8] sm:$0xff]
      %v415 = vld [vmem:[%s219 + $0x10] sm:$0xff]
      %v416 = vld [vmem:[%s219 + $0x18] sm:$0xff]
      %421 = vrot.lane.b32.xlu0 %v413, 90
      %v422 = vpop.permute.xlu0 %421
      %423 = vrot.lane.b32.xlu0 %v414, 90
      %v424 = vpop.permute.xlu0 %423
      %425 = vrot.lane.b32.xlu0 %v415, 90
      %v426 = vpop.permute.xlu0 %425
      %427 = vrot.lane.b32.xlu0 %v416, 90
      %v428 = vpop.permute.xlu0 %427
      %vm429 = vcmask 736256
      %v430 = vsel %vm429, %v422, %v424
      %v431 = vsel %vm429, %v424, %v426
      %v432 = vsel %vm429, %v426, %v428
      %436 = vst [vmem:[#allocation2 + $0xc0] sm:$0xff] %v430
      %437 = vst [vmem:[#allocation2 + $0xc8] sm:$0xff] %v431
      %438 = vst [vmem:[#allocation2 + $0xd0] sm:$0xff] %v432
      %v439 = vld [vmem:[%s1] sm:$0xff]
      %v440 = vld [vmem:[%s1 + $0x8] sm:$0xff]
      %v441 = vld [vmem:[#allocation2] sm:$0xff]
      %v442 = vld [vmem:[#allocation2 + $0x8] sm:$0xff]
      %v443 = vld [vmem:[#allocation2 + $0x10] sm:$0xff]
      %v444 = vld [vmem:[#allocation2 + $0x18] sm:$0xff]
      %v445 = vld [vmem:[#allocation2 + $0x20] sm:$0xff]
      %v446 = vld [vmem:[#allocation2 + $0x28] sm:$0xff]
      %v447 = vld [vmem:[#allocation2 + $0x30] sm:$0xff]
      %v448 = vld [vmem:[#allocation2 + $0x38] sm:$0xff]
      %v449 = vld [vmem:[#allocation2 + $0x40] sm:$0xff]
      %v450 = vld [vmem:[#allocation2 + $0x48] sm:$0xff]
      %v451 = vld [vmem:[#allocation2 + $0x50] sm:$0xff]
      %v452 = vld [vmem:[#allocation2 + $0x58] sm:$0xff]
      %v453 = vld [vmem:[#allocation2 + $0x60] sm:$0xff]
      %v454 = vld [vmem:[#allocation2 + $0x68] sm:$0xff]
      %v455 = vld [vmem:[#allocation2 + $0x70] sm:$0xff]
      %v456 = vld [vmem:[#allocation2 + $0x78] sm:$0xff]
      %v457 = vld [vmem:[#allocation2 + $0x80] sm:$0xff]
      %v458 = vld [vmem:[#allocation2 + $0x88] sm:$0xff]
      %v459 = vld [vmem:[#allocation2 + $0x90] sm:$0xff]
      %v460 = vld [vmem:[#allocation2 + $0x98] sm:$0xff]
      %v461 = vld [vmem:[#allocation2 + $0xa0] sm:$0xff]
      %v462 = vld [vmem:[#allocation2 + $0xa8] sm:$0xff]
      %v463 = vld [vmem:[#allocation2 + $0xb0] sm:$0xff]
      %v464 = vld [vmem:[#allocation2 + $0xb8] sm:$0xff]
      %v465 = vld [vmem:[#allocation2 + $0xc0] sm:$0xff]
      %v466 = vld [vmem:[#allocation2 + $0xc8] sm:$0xff]
      %v467 = vld [vmem:[#allocation2 + $0xd0] sm:$0xff]
      %vm468 = vcmask 588800
      %v470 = vsel %vm468, %v439, 0
      %v473 = vsel %vm468, %v440, 0
      %475 = vmatprep.subr.mxu0 %v442
      %476 = vmatpush1.msra.mxu0 %v441
      %477 = vmatprep.subr.mxu0 %v445
      %478 = vmatpush1.msra.mxu0 %v444
      %479 = vmatprep.subr.mxu0 %v448
      %480 = vmatpush1.msra.mxu0 %v447
      %481 = vmatprep.subr.mxu0 %v451
      %482 = vmatpush1.msra.mxu0 %v450
      %483 = vmatprep.subr.mxu0 %v454
      %484 = vmatpush1.msra.mxu0 %v453
      %485 = vmatprep.subr.mxu0 %v457
      %486 = vmatpush1.msra.mxu0 %v456
      %487 = vmatprep.subr.mxu0 %v460
      %488 = vmatpush1.msra.mxu0 %v459
      %489 = vmatprep.subr.mxu0 %v463
      %490 = vmatpush1.msra.mxu0 %v462
      %491 = vmatprep.subr.mxu0 %v466
      %492 = vmatpush1.msra.mxu0 %v465
      %493 = vmatprep.subr.mxu0 0.0
      %494 = vmatpush1.msra.mxu0 0.0
      %495 = vmatprep.subr.mxu0 0.0
      %496 = vmatpush1.msra.mxu0 0.0
      %497 = vmatprep.subr.mxu0 0.0
      %498 = vmatpush1.msra.mxu0 0.0
      %499 = vmatprep.subr.mxu0 0.0
      %500 = vmatpush1.msra.mxu0 0.0
      %501 = vmatprep.subr.mxu0 0.0
      %502 = vmatpush1.msra.mxu0 0.0
      %503 = vmatprep.subr.mxu0 0.0
      %504 = vmatpush1.msra.mxu0 0.0
      %505 = vmatprep.subr.mxu0 0.0
      %506 = vmatpush1.msra.mxu0 0.0
      %507 = vmatprep.subr.mxu0 0.0
      %508 = vmatpush1.msra.mxu0 0.0
      %509 = vmatprep.subr.mxu0 0.0
      %510 = vmatpush1.msra.mxu0 0.0
      %511 = vmatprep.subr.mxu0 0.0
      %512 = vmatpush1.msra.mxu0 0.0
      %513 = vmatprep.subr.mxu0 0.0
      %514 = vmatpush1.msra.mxu0 0.0
      %515 = vmatprep.subr.mxu0 0.0
      %516 = vmatpush1.msra.mxu0 0.0
      %517 = vmatprep.subr.mxu0 0.0
      %518 = vmatpush1.msra.mxu0 0.0
      %519 = vmatprep.subr.mxu0 0.0
      %520 = vmatpush1.msra.mxu0 0.0
      %521 = vmatprep.subr.mxu0 0.0
      %522 = vmatpush1.msra.mxu0 0.0
      %523 = vmatprep.subr.mxu0 0.0
      %524 = vmatpush1.msra.mxu0 0.0
      %525 = vmatprep.subr.mxu0 0.0
      %526 = vmatpush1.msra.mxu0 0.0
      %527 = vmatprep.subr.mxu0 0.0
      %528 = vmatpush1.msra.mxu0 0.0
      %529 = vmatprep.subr.mxu0 0.0
      %530 = vmatpush1.msra.mxu0 0.0
      %531 = vmatprep.subr.mxu0 0.0
      %532 = vmatpush1.msra.mxu0 0.0
      %533 = vmatprep.subr.mxu0 0.0
      %534 = vmatpush1.msra.mxu0 0.0
      %535 = vmatprep.subr.mxu0 0.0
      %536 = vmatpush1.msra.mxu0 0.0
      %537 = vmatprep.subr.mxu0 0.0
      %538 = vmatpush1.msra.mxu0 0.0
      %539 = vmatprep.mubr.f32.mxu0 0.0
      %540 = vmatmul.mubr.f32.gmra.mrb[0].mxu0 %v470
      %v541 = vpop.f32.mrb[0].mxu0
      %v542 = vadd.f32 0.0, %v541
      %v543 = vpop.f32.mrb[0].mxu0
      %v544 = vadd.f32 0.0, %v543
      %545 = vmatprep.mubr.f32.mxu0 0.0
      %546 = vmatmul.mubr.f32.gmra.mrb[0].mxu0 %v473
      %v547 = vpop.f32.mrb[0].mxu0
      %v548 = vadd.f32 0.0, %v547
      %v549 = vpop.f32.mrb[0].mxu0
      %v550 = vadd.f32 0.0, %v549
      %551 = vdwg.mxu0
      %552 = vmatprep.subr.mxu0 0.0
      %553 = vmatpush1.msra.mxu0 %v443
      %554 = vmatprep.subr.mxu0 0.0
      %555 = vmatpush1.msra.mxu0 %v446
      %556 = vmatprep.subr.mxu0 0.0
      %557 = vmatpush1.msra.mxu0 %v449
      %558 = vmatprep.subr.mxu0 0.0
      %559 = vmatpush1.msra.mxu0 %v452
      %560 = vmatprep.subr.mxu0 0.0
      %561 = vmatpush1.msra.mxu0 %v455
      %562 = vmatprep.subr.mxu0 0.0
      %563 = vmatpush1.msra.mxu0 %v458
      %564 = vmatprep.subr.mxu0 0.0
      %565 = vmatpush1.msra.mxu0 %v461
      %566 = vmatprep.subr.mxu0 0.0
      %567 = vmatpush1.msra.mxu0 %v464
      %568 = vmatprep.subr.mxu0 0.0
      %569 = vmatpush1.msra.mxu0 %v467
      %570 = vmatprep.subr.mxu0 0.0
      %571 = vmatpush1.msra.mxu0 0.0
      %572 = vmatprep.subr.mxu0 0.0
      %573 = vmatpush1.msra.mxu0 0.0
      %574 = vmatprep.subr.mxu0 0.0
      %575 = vmatpush1.msra.mxu0 0.0
      %576 = vmatprep.subr.mxu0 0.0
      %577 = vmatpush1.msra.mxu0 0.0
      %578 = vmatprep.subr.mxu0 0.0
      %579 = vmatpush1.msra.mxu0 0.0
      %580 = vmatprep.subr.mxu0 0.0
      %581 = vmatpush1.msra.mxu0 0.0
      %582 = vmatprep.subr.mxu0 0.0
      %583 = vmatpush1.msra.mxu0 0.0
      %584 = vmatprep.subr.mxu0 0.0
      %585 = vmatpush1.msra.mxu0 0.0
      %586 = vmatprep.subr.mxu0 0.0
      %587 = vmatpush1.msra.mxu0 0.0
      %588 = vmatprep.subr.mxu0 0.0
      %589 = vmatpush1.msra.mxu0 0.0
      %590 = vmatprep.subr.mxu0 0.0
      %591 = vmatpush1.msra.mxu0 0.0
      %592 = vmatprep.subr.mxu0 0.0
      %593 = vmatpush1.msra.mxu0 0.0
      %594 = vmatprep.subr.mxu0 0.0
      %595 = vmatpush1.msra.mxu0 0.0
      %596 = vmatprep.subr.mxu0 0.0
      %597 = vmatpush1.msra.mxu0 0.0
      %598 = vmatprep.subr.mxu0 0.0
      %599 = vmatpush1.msra.mxu0 0.0
      %600 = vmatprep.subr.mxu0 0.0
      %601 = vmatpush1.msra.mxu0 0.0
      %602 = vmatprep.subr.mxu0 0.0
      %603 = vmatpush1.msra.mxu0 0.0
      %604 = vmatprep.subr.mxu0 0.0
      %605 = vmatpush1.msra.mxu0 0.0
      %606 = vmatprep.subr.mxu0 0.0
      %607 = vmatpush1.msra.mxu0 0.0
      %608 = vmatprep.subr.mxu0 0.0
      %609 = vmatpush1.msra.mxu0 0.0
      %610 = vmatprep.subr.mxu0 0.0
      %611 = vmatpush1.msra.mxu0 0.0
      %612 = vmatprep.subr.mxu0 0.0
      %613 = vmatpush1.msra.mxu0 0.0
      %614 = vmatprep.subr.mxu0 0.0
      %615 = vmatpush1.msra.mxu0 0.0
      %616 = vmatprep.mubr.f32.mxu0 0.0
      %617 = vmatmul.mubr.f32.gmra.mrb[0].mxu0 %v470
      %v618 = vpop.f32.mrb[0].mxu0
      %v619 = vadd.f32 0.0, %v618
      %v620 = vpop.f32.mrb[0].mxu0
      %621 = vmatprep.mubr.f32.mxu0 0.0
      %622 = vmatmul.mubr.f32.gmra.mrb[0].mxu0 %v473
      %v623 = vpop.f32.mrb[0].mxu0
      %v624 = vadd.f32 0.0, %v623
      %v625 = vpop.f32.mrb[0].mxu0
      %626 = vdwg.mxu0
      %v627 = vmax.f32 %v542, 0.0
      %v628 = vmax.f32 %v544, 0.0
      %v629 = vmax.f32 %v619, 0.0
      %v630 = vld [vmem:[%s3] sm:$0xff]
      %632 = vset.pattern.permute.xlu0 0
      %633 = vperm.xlu0 %632, %v630
      %v634 = vpop.permute.xlu0 %633
      %v636 = vmul.f32 %v627, %v634
      %v637 = vmul.f32 %v628, %v634
      %v638 = vmul.f32 %v629, %v634
      %v639 = vld [vmem:[%s4] sm:$0xff]
      %641 = vset.pattern.permute.xlu0 0
      %642 = vperm.xlu0 %641, %v639
      %v643 = vpop.permute.xlu0 %642
      %v645 = vadd.f32 %v636, %v643
      %v646 = vadd.f32 %v637, %v643
      %v647 = vadd.f32 %v638, %v643
      %v648 = vadd.f32 %v548, %v645
      %v649 = vadd.f32 %v550, %v646
      %v650 = vadd.f32 %v624, %v647
      %651 = vst [vmem:[#allocation3] sm:$0xff] %v648
      %652 = vst [vmem:[#allocation3 + $0x8] sm:$0xff] %v649
      %653 = vst [vmem:[#allocation3 + $0x10] sm:$0xff] %v650
      %v654 = vld [vmem:[#allocation3] sm:$0xff]
      %v655 = vld [vmem:[#allocation3 + $0x8] sm:$0xff]
      %656 = vst [vmem:[#allocation4] sm:$0xff] %v654
      %657 = vst [vmem:[#allocation4 + $0x8] sm:$0xff] %v655
      %v658 = vld [vmem:[#allocation3] sm:$0xff]
      %v659 = vld [vmem:[#allocation3 + $0x8] sm:$0xff]
      %v660 = vld [vmem:[#allocation3 + $0x10] sm:$0xff]
      %664 = vrot.lane.b32.xlu0 %v658, 127
      %v665 = vpop.permute.xlu0 %664
      %666 = vrot.lane.b32.xlu0 %v659, 127
      %v667 = vpop.permute.xlu0 %666
      %668 = vrot.lane.b32.xlu0 %v660, 127
      %v669 = vpop.permute.xlu0 %668
      %v670 = vsel %vm247, %v665, %v667
      %v671 = vsel %vm247, %v667, %v669
      %674 = vst [vmem:[#allocation4 + $0x10] sm:$0xff] %v670
      %675 = vst [vmem:[#allocation4 + $0x18] sm:$0xff] %v671
      %v676 = vld [vmem:[#allocation3] sm:$0xff]
      %v677 = vld [vmem:[#allocation3 + $0x8] sm:$0xff]
      %v678 = vld [vmem:[#allocation3 + $0x10] sm:$0xff]
      %682 = vrot.lane.b32.xlu0 %v676, 126
      %v683 = vpop.permute.xlu0 %682
      %684 = vrot.lane.b32.xlu0 %v677, 126
      %v685 = vpop.permute.xlu0 %684
      %686 = vrot.lane.b32.xlu0 %v678, 126
      %v687 = vpop.permute.xlu0 %686
      %v688 = vsel %vm273, %v683, %v685
      %v689 = vsel %vm273, %v685, %v687
      %692 = vst [vmem:[#allocation4 + $0x20] sm:$0xff] %v688
      %693 = vst [vmem:[#allocation4 + $0x28] sm:$0xff] %v689
      %v694 = vld [vmem:[#allocation3] sm:$0xff]
      %v695 = vld [vmem:[#allocation3 + $0x8] sm:$0xff]
      %v696 = vld [vmem:[#allocation3 + $0x10] sm:$0xff]
      %700 = vrot.lane.b32.xlu0 %v694, 110
      %v701 = vpop.permute.xlu0 %700
      %702 = vrot.lane.b32.xlu0 %v695, 110
      %v703 = vpop.permute.xlu0 %702
      %704 = vrot.lane.b32.xlu0 %v696, 110
      %v705 = vpop.permute.xlu0 %704
      %v706 = vsel %vm299, %v701, %v703
      %v707 = vsel %vm299, %v703, %v705
      %710 = vst [vmem:[#allocation4 + $0x30] sm:$0xff] %v706
      %711 = vst [vmem:[#allocation4 + $0x38] sm:$0xff] %v707
      %v712 = vld [vmem:[#allocation3] sm:$0xff]
      %v713 = vld [vmem:[#allocation3 + $0x8] sm:$0xff]
      %v714 = vld [vmem:[#allocation3 + $0x10] sm:$0xff]
      %718 = vrot.lane.b32.xlu0 %v712, 109
      %v719 = vpop.permute.xlu0 %718
      %720 = vrot.lane.b32.xlu0 %v713, 109
      %v721 = vpop.permute.xlu0 %720
      %722 = vrot.lane.b32.xlu0 %v714, 109
      %v723 = vpop.permute.xlu0 %722
      %v724 = vsel %vm325, %v719, %v721
      %v725 = vsel %vm325, %v721, %v723
      %728 = vst [vmem:[#allocation4 + $0x40] sm:$0xff] %v724
      %729 = vst [vmem:[#allocation4 + $0x48] sm:$0xff] %v725
      %v730 = vld [vmem:[#allocation3] sm:$0xff]
      %v731 = vld [vmem:[#allocation3 + $0x8] sm:$0xff]
      %v732 = vld [vmem:[#allocation3 + $0x10] sm:$0xff]
      %736 = vrot.lane.b32.xlu0 %v730, 108
      %v737 = vpop.permute.xlu0 %736
      %738 = vrot.lane.b32.xlu0 %v731, 108
      %v739 = vpop.permute.xlu0 %738
      %740 = vrot.lane.b32.xlu0 %v732, 108
      %v741 = vpop.permute.xlu0 %740
      %v742 = vsel %vm351, %v737, %v739
      %v743 = vsel %vm351, %v739, %v741
      %746 = vst [vmem:[#allocation4 + $0x50] sm:$0xff] %v742
      %747 = vst [vmem:[#allocation4 + $0x58] sm:$0xff] %v743
      %v748 = vld [vmem:[#allocation3] sm:$0xff]
      %v749 = vld [vmem:[#allocation3 + $0x8] sm:$0xff]
      %v750 = vld [vmem:[#allocation3 + $0x10] sm:$0xff]
      %754 = vrot.lane.b32.xlu0 %v748, 92
      %v755 = vpop.permute.xlu0 %754
      %756 = vrot.lane.b32.xlu0 %v749, 92
      %v757 = vpop.permute.xlu0 %756
      %758 = vrot.lane.b32.xlu0 %v750, 92
      %v759 = vpop.permute.xlu0 %758
      %v760 = vsel %vm377, %v755, %v757
      %v761 = vsel %vm377, %v757, %v759
      %764 = vst [vmem:[#allocation4 + $0x60] sm:$0xff] %v760
      %765 = vst [vmem:[#allocation4 + $0x68] sm:$0xff] %v761
      %v766 = vld [vmem:[#allocation3] sm:$0xff]
      %v767 = vld [vmem:[#allocation3 + $0x8] sm:$0xff]
      %v768 = vld [vmem:[#allocation3 + $0x10] sm:$0xff]
      %772 = vrot.lane.b32.xlu0 %v766, 91
      %v773 = vpop.permute.xlu0 %772
      %774 = vrot.lane.b32.xlu0 %v767, 91
      %v775 = vpop.permute.xlu0 %774
      %776 = vrot.lane.b32.xlu0 %v768, 91
      %v777 = vpop.permute.xlu0 %776
      %v778 = vsel %vm403, %v773, %v775
      %v779 = vsel %vm403, %v775, %v777
      %782 = vst [vmem:[#allocation4 + $0x70] sm:$0xff] %v778
      %783 = vst [vmem:[#allocation4 + $0x78] sm:$0xff] %v779
      %v784 = vld [vmem:[#allocation3] sm:$0xff]
      %v785 = vld [vmem:[#allocation3 + $0x8] sm:$0xff]
      %v786 = vld [vmem:[#allocation3 + $0x10] sm:$0xff]
      %790 = vrot.lane.b32.xlu0 %v784, 90
      %v791 = vpop.permute.xlu0 %790
      %792 = vrot.lane.b32.xlu0 %v785, 90
      %v793 = vpop.permute.xlu0 %792
      %794 = vrot.lane.b32.xlu0 %v786, 90
      %v795 = vpop.permute.xlu0 %794
      %v796 = vsel %vm429, %v791, %v793
      %v797 = vsel %vm429, %v793, %v795
      %800 = vst [vmem:[#allocation4 + $0x80] sm:$0xff] %v796
      %801 = vst [vmem:[#allocation4 + $0x88] sm:$0xff] %v797
      %v802 = vld [vmem:[%s2] sm:$0xff]
      %v803 = vld [vmem:[#allocation4] sm:$0xff]
      %v804 = vld [vmem:[#allocation4 + $0x8] sm:$0xff]
      %v805 = vld [vmem:[#allocation4 + $0x10] sm:$0xff]
      %v806 = vld [vmem:[#allocation4 + $0x18] sm:$0xff]
      %v807 = vld [vmem:[#allocation4 + $0x20] sm:$0xff]
      %v808 = vld [vmem:[#allocation4 + $0x28] sm:$0xff]
      %v809 = vld [vmem:[#allocation4 + $0x30] sm:$0xff]
      %v810 = vld [vmem:[#allocation4 + $0x38] sm:$0xff]
      %v811 = vld [vmem:[#allocation4 + $0x40] sm:$0xff]
      %v812 = vld [vmem:[#allocation4 + $0x48] sm:$0xff]
      %v813 = vld [vmem:[#allocation4 + $0x50] sm:$0xff]
      %v814 = vld [vmem:[#allocation4 + $0x58] sm:$0xff]
      %v815 = vld [vmem:[#allocation4 + $0x60] sm:$0xff]
      %v816 = vld [vmem:[#allocation4 + $0x68] sm:$0xff]
      %v817 = vld [vmem:[#allocation4 + $0x70] sm:$0xff]
      %v818 = vld [vmem:[#allocation4 + $0x78] sm:$0xff]
      %v819 = vld [vmem:[#allocation4 + $0x80] sm:$0xff]
      %v820 = vld [vmem:[#allocation4 + $0x88] sm:$0xff]
      %v822 = vsel %vm468, %v802, 0
      %824 = vmatprep.subr.mxu0 %v804
      %825 = vmatpush1.msra.mxu0 %v803
      %826 = vmatprep.subr.mxu0 %v806
      %827 = vmatpush1.msra.mxu0 %v805
      %828 = vmatprep.subr.mxu0 %v808
      %829 = vmatpush1.msra.mxu0 %v807
      %830 = vmatprep.subr.mxu0 %v810
      %831 = vmatpush1.msra.mxu0 %v809
      %832 = vmatprep.subr.mxu0 %v812
      %833 = vmatpush1.msra.mxu0 %v811
      %834 = vmatprep.subr.mxu0 %v814
      %835 = vmatpush1.msra.mxu0 %v813
      %836 = vmatprep.subr.mxu0 %v816
      %837 = vmatpush1.msra.mxu0 %v815
      %838 = vmatprep.subr.mxu0 %v818
      %839 = vmatpush1.msra.mxu0 %v817
      %840 = vmatprep.subr.mxu0 %v820
      %841 = vmatpush1.msra.mxu0 %v819
      %842 = vmatprep.subr.mxu0 0.0
      %843 = vmatpush1.msra.mxu0 0.0
      %844 = vmatprep.subr.mxu0 0.0
      %845 = vmatpush1.msra.mxu0 0.0
      %846 = vmatprep.subr.mxu0 0.0
      %847 = vmatpush1.msra.mxu0 0.0
      %848 = vmatprep.subr.mxu0 0.0
      %849 = vmatpush1.msra.mxu0 0.0
      %850 = vmatprep.subr.mxu0 0.0
      %851 = vmatpush1.msra.mxu0 0.0
      %852 = vmatprep.subr.mxu0 0.0
      %853 = vmatpush1.msra.mxu0 0.0
      %854 = vmatprep.subr.mxu0 0.0
      %855 = vmatpush1.msra.mxu0 0.0
      %856 = vmatprep.subr.mxu0 0.0
      %857 = vmatpush1.msra.mxu0 0.0
      %858 = vmatprep.subr.mxu0 0.0
      %859 = vmatpush1.msra.mxu0 0.0
      %860 = vmatprep.subr.mxu0 0.0
      %861 = vmatpush1.msra.mxu0 0.0
      %862 = vmatprep.subr.mxu0 0.0
      %863 = vmatpush1.msra.mxu0 0.0
      %864 = vmatprep.subr.mxu0 0.0
      %865 = vmatpush1.msra.mxu0 0.0
      %866 = vmatprep.subr.mxu0 0.0
      %867 = vmatpush1.msra.mxu0 0.0
      %868 = vmatprep.subr.mxu0 0.0
      %869 = vmatpush1.msra.mxu0 0.0
      %870 = vmatprep.subr.mxu0 0.0
      %871 = vmatpush1.msra.mxu0 0.0
      %872 = vmatprep.subr.mxu0 0.0
      %873 = vmatpush1.msra.mxu0 0.0
      %874 = vmatprep.subr.mxu0 0.0
      %875 = vmatpush1.msra.mxu0 0.0
      %876 = vmatprep.subr.mxu0 0.0
      %877 = vmatpush1.msra.mxu0 0.0
      %878 = vmatprep.subr.mxu0 0.0
      %879 = vmatpush1.msra.mxu0 0.0
      %880 = vmatprep.subr.mxu0 0.0
      %881 = vmatpush1.msra.mxu0 0.0
      %882 = vmatprep.subr.mxu0 0.0
      %883 = vmatpush1.msra.mxu0 0.0
      %884 = vmatprep.subr.mxu0 0.0
      %885 = vmatpush1.msra.mxu0 0.0
      %886 = vmatprep.subr.mxu0 0.0
      %887 = vmatpush1.msra.mxu0 0.0
      %888 = vmatprep.mubr.f32.mxu0 0.0
      %889 = vmatmul.mubr.f32.gmra.mrb[0].mxu0 %v822
      %v890 = vpop.f32.mrb[0].mxu0
      %v891 = vadd.f32 0.0, %v890
      %v892 = vpop.f32.mrb[0].mxu0
      %v893 = vadd.f32 0.0, %v892
      %894 = vdwg.mxu0
      %895 = vst [vmem:[%s224] sm:$0xff] %v891
      %896 = vst [vmem:[%s224 + $0x8] sm:$0xff] %v893
      %p897 = scmp.lt.s32.totalorder %s16, 1
      %s898 = scalar_select %p897, %s16, 1
      %s899 = smul.addr %s898, 2
      %s900 = smul.addr %s899, 8
      %s901 = scalar_lea.vmem %s5, %s900
      // Predicated region
      $region41: #{input_block_forward.1} parent=39 // pred_check
        %p902 = pneg %p144
      $region42: #{input_block_forward.1} parent=39 // pred_check_branch
        %904 = sbr.rel (%p902) target = $region44
      $region43: #{input_block_forward.1} parent=39 // pred_region
        _
      $region44: #{input_block_forward.1} parent=39 // pred_fallthru
        _
    $region40: #{input_block_forward.1} parent=5 // pred_fallthru
      _
    %p905 = scmp.le.s32.totalorder 2, %s11
    // Predicated region
    $region45: #{input_block_forward.1} parent=5 // pred_check
      %p906 = pneg %p905
    $region46: #{input_block_forward.1} parent=5 // pred_check_branch
      %908 = sbr.rel (%p906) target = $region48
    $region47: #{input_block_forward.1} parent=5 // pred_region
      %s909 = ssub.s32 %s11, 2
      // Predicated region
      $region49: #{input_block_forward.1} parent=47 // pred_check
        %p910 = pneg %p150
      $region50: #{input_block_forward.1} parent=47 // pred_check_branch
        %912 = sbr.rel (%p910) target = $region52
      $region51: #{input_block_forward.1} parent=47 // pred_region
        %p913 = scmp.lt.s32.totalorder %s17, 1
        %s914 = scalar_select %p913, %s17, 1
        %s915 = smul.addr %s914, 2
        %s916 = smul.addr %s915, 8
        %s917 = scalar_lea.vmem %s5, %s916
      $region52: #{input_block_forward.1} parent=47 // pred_fallthru
        _
    $region48: #{input_block_forward.1} parent=5 // pred_fallthru
      _
  $region6: #{input_block_forward.1} parent=0 // loop_footer
    %s15 = sadd.s32 1, %s11
  $region7: #{input_block_forward.1} parent=0 // loop_footer_branch
    %10 = sbr.rel target = $region3
  $region8: #{input_block_forward.1} parent=0 // loop_exit
    _

</llo_original>
